<compile_context>
chip_gen: v7x
topology: tpu7x:2x2x1
jax: 0.10.0
libtpu: 0.0.40
codegen_flags: <defaults>
</compile_context>

<pallas_src>
import functools
import math

import jax
import jax.numpy as jnp
from jax.experimental import pallas as pl
from jax.experimental.pallas import tpu as pltpu

_MAX_TILE_ROWS = 8192                 # growth plateaus ~1-2 MiB per step
_DMA_TARGET_BYTES = 2 * 1024 * 1024   # aim for >= ~2 MiB moved per grid step
_VMEM_BUDGET_BYTES = 16 * 1024 * 1024 # double-buffered tiles + f32 temporaries


def _pick_tile_rows(n_rows, d, c, in_itemsize):
    """Choose a row tile from D, C and a VMEM budget (not a hardcoded size)."""
    cols = 2 * d + c + 1  # Y + X + y_hat + y columns per row
    # Amortize per-step overhead: move at least ~_DMA_TARGET_BYTES per step.
    target = max(1024, _DMA_TARGET_BYTES // max(1, cols * in_itemsize))
    # VMEM cap: 2x double-buffered input tiles + live f32 temporaries per row
    # (f32 copies of Y/X/y_hat, exp(Y), X*Y, log(X), picked, ...).
    per_row_vmem = 2 * cols * in_itemsize + (6 * d + 2 * c + 8) * 4
    cap = max(8, _VMEM_BUDGET_BYTES // per_row_vmem)
    t = min(target, cap, _MAX_TILE_ROWS)
    if n_rows <= t:
        return n_rows                  # single full block (no (8,·) constraint)
    return max(8, (t // 8) * 8)        # tiled: sublane dim must be 8-aligned


def _combined_loss_kernel(scal_ref, y_ref, x_ref, yhat_ref, ycls_ref, out_ref,
                          coda_acc, nll_acc,
                          *, n_rows, tile_rows, steps_per_core):
    i = pl.program_id(1)

    @pl.when(i == 0)
    def _init():
        coda_acc[...] = jnp.zeros_like(coda_acc)
        nll_acc[...] = jnp.zeros_like(nll_acc)

    # Upcast after the Ref load (inputs may arrive bf16; HBM traffic stays narrow).
    Y = y_ref[...].astype(jnp.float32)        # (t, D)
    X = x_ref[...].astype(jnp.float32)        # (t, D)
    yhat = yhat_ref[...].astype(jnp.float32)  # (t, C)
    ycls = ycls_ref[...]                      # (t, 1) int32

    D = X.shape[1]

    # Global row index from the *unclamped* logical block id; rows belonging to
    # padded / clamped grid steps and the ragged tail are masked out below.
    logical_block = pl.program_id(0) * steps_per_core + i
    row_idx = logical_block * tile_rows + jax.lax.broadcasted_iota(
        jnp.int32, (tile_rows, 1), 0)
    row_valid = row_idx < n_rows              # (t, 1) bool

    # ---- CoDA loss, per-row, strength-reduced ----
    # Geometric mean in log domain (X > 0 per check() semantics):
    #   inv_gmean = exp(-max(mean(log X), log 1e-8)) == 1 / clamp(gmean, 1e-8)
    log_gmean = jnp.sum(jnp.log(X), axis=1, keepdims=True) * (1.0 / D)      # (t, 1)
    log_gmean = jnp.maximum(log_gmean, jnp.float32(math.log(1e-8)))
    inv_gmean = jnp.exp(-log_gmean)                                          # (t, 1)

    exp_row = jnp.sum(jnp.exp(jnp.clip(Y, -30.0, 30.0)), axis=1, keepdims=True)
    row_dot = jnp.sum(X * Y, axis=1, keepdims=True)                          # <X_i, Y_i>
    coda_rows = exp_row - row_dot * inv_gmean                                # (t, 1)
    # Mask with a select BEFORE the cross-row reduction (keeps NaN/Inf from
    # padded rows out of the accumulator).
    coda_acc[...] += jnp.sum(jnp.where(row_valid, coda_rows, 0.0))

    # ---- NLLLoss (reduction='mean'): gather-free via iota + where ----
    col = jax.lax.broadcasted_iota(jnp.int32, yhat.shape, 1)                 # (t, C)
    picked = jnp.where(col == ycls, yhat, 0.0)                               # (t, C)
    picked_rows = jnp.sum(picked, axis=1, keepdims=True)                     # (t, 1)
    nll_acc[...] += jnp.sum(jnp.where(row_valid, picked_rows, 0.0))

    # Single write of this core's partial at its last grid step.
    @pl.when(i == steps_per_core - 1)
    def _finalize():
        lam = scal_ref[0]                                                    # SMEM scalar
        out_ref[...] = (lam * coda_acc[...]
                        - nll_acc[...] * jnp.float32(1.0 / n_rows))


def combined_loss(Y, X, y_hat, y, lam):
    """Pallas implementation of Combined_Loss(lam).forward(Y, X, y_hat, y)."""
    N, D = X.shape
    C = y_hat.shape[1]

    in_itemsize = max(jnp.dtype(Y.dtype).itemsize,
                      jnp.dtype(X.dtype).itemsize,
                      jnp.dtype(y_hat.dtype).itemsize)
    tile_rows = _pick_tile_rows(N, D, C, in_itemsize)
    num_blocks = pl.cdiv(N, tile_rows)

    # Split row blocks across v7x's two TensorCores (serial loop on v5e/v6e).
    num_cores = 2 if num_blocks >= 2 else 1
    steps_per_core = pl.cdiv(num_blocks, num_cores)

    y2d = y.astype(jnp.int32).reshape(N, 1)
    scal = jnp.asarray([lam], dtype=jnp.float32)   # runtime scalar: no recompile per lam

    def row_map(c, i):
        # Clamp padded steps to the last valid block; the kernel masks them out
        # via the unclamped logical block id.
        return (jnp.minimum(c * steps_per_core + i, num_blocks - 1), 0)

    kernel = functools.partial(_combined_loss_kernel, n_rows=N,
                               tile_rows=tile_rows,
                               steps_per_core=steps_per_core)
    out = pl.pallas_call(
        kernel,
        out_shape=jax.ShapeDtypeStruct((num_cores, 1), jnp.float32),
        grid=(num_cores, steps_per_core),
        in_specs=[
            pl.BlockSpec(memory_space=pltpu.MemorySpace.SMEM),        # [lam]
            pl.BlockSpec((tile_rows, D), row_map),                    # Y
            pl.BlockSpec((tile_rows, D), row_map),                    # X
            pl.BlockSpec((tile_rows, C), row_map),                    # y_hat
            pl.BlockSpec((tile_rows, 1), row_map),                    # y as (N,1) i32
        ],
        out_specs=pl.BlockSpec((1, 1), lambda c, i: (c, 0)),          # per-core partial
        scratch_shapes=[pltpu.VMEM((1, 1), jnp.float32),              # coda accumulator
                        pltpu.VMEM((1, 1), jnp.float32)],             # nll-sum accumulator
        compiler_params=pltpu.CompilerParams(
            dimension_semantics=("parallel", "arbitrary"),
            vmem_limit_bytes=32 * 1024 * 1024),
    )(scal, Y, X, y_hat, y2d)
    return jnp.sum(out)


def _reference(Y, X, y_hat, y, lam):
    """Pure-JAX reference mirroring the PyTorch semantics (sanity check)."""
    D = X.shape[1]
    gmean = jnp.prod(X, axis=1) ** (1.0 / D)
    x_check = X / jnp.maximum(gmean, 1e-8)[:, None]
    coda = jnp.sum(jnp.exp(jnp.clip(Y, -30.0, 30.0))) - jnp.sum(x_check * Y)
    nll = -jnp.mean(jnp.take_along_axis(y_hat, y[:, None], axis=1))
    return nll + lam * coda


if __name__ == "__main__":
    key = jax.random.PRNGKey(0)
    k1, k2, k3, k4 = jax.random.split(key, 4)

    lam = 0.5

    # Small shapes consistent with the module (plain 2-D matrices, no convs).
    N, D, C = 8, 16, 8
    X = jax.random.uniform(k1, (N, D), jnp.float32, minval=0.1, maxval=1.0)
    Y = jax.random.normal(k2, (N, D), jnp.float32)
    y_hat = jax.nn.log_softmax(jax.random.normal(k3, (N, C), jnp.float32), axis=-1)
    y = jax.random.randint(k4, (N,), 0, C, jnp.int32)

    out = jax.block_until_ready(combined_loss(Y, X, y_hat, y, lam))
    ref = jax.block_until_ready(_reference(Y, X, y_hat, y, lam))
    assert jnp.allclose(out, ref, rtol=1e-5, atol=1e-4), (out, ref)

    # Larger case: multiple row blocks (ragged last tile), two-core grid with a
    # clamped padding step, resident scratch accumulators.
    N2 = 20000
    X2 = jax.random.uniform(k1, (N2, D), jnp.float32, minval=0.1, maxval=1.0)
    Y2 = jax.random.normal(k2, (N2, D), jnp.float32)
    y_hat2 = jax.nn.log_softmax(jax.random.normal(k3, (N2, C), jnp.float32), axis=-1)
    y2 = jax.random.randint(k4, (N2,), 0, C, jnp.int32)

    out2 = jax.block_until_ready(combined_loss(Y2, X2, y_hat2, y2, lam))
    ref2 = jax.block_until_ready(_reference(Y2, X2, y_hat2, y2, lam))
    assert jnp.allclose(out2, ref2, rtol=5e-4, atol=1e-2), (out2, ref2)

    print("KERNEL_OK")
</pallas_src>

<mosaic_0001>
module attributes {stable_mosaic.version = 11 : i64} {
  func.func @_combined_loss_kernel(%arg0: i32, %arg1: i32, %arg2: memref<1xf32, #tpu.memory_space<smem>>, %arg3: memref<8x16xf32, #tpu.memory_space<vmem>>, %arg4: memref<8x16xf32, #tpu.memory_space<vmem>>, %arg5: memref<8x8xf32, #tpu.memory_space<vmem>>, %arg6: memref<8x1xi32, #tpu.memory_space<vmem>>, %arg7: memref<1x1xf32, #tpu.memory_space<vmem>>, %arg8: memref<1x1xf32, #tpu.memory_space<vmem>>, %arg9: memref<1x1xf32, #tpu.memory_space<vmem>>) attributes {dimension_semantics = [#tpu.dimension_semantics<parallel>, #tpu.dimension_semantics<arbitrary>], iteration_bounds = array<i64: 1, 1>, scalar_prefetch = 0 : i64, scratch_operands = 2 : i64, tpu.core_type = #tpu.core_type<tc>, window_params = [{transform_indices = @transform_0, window_bounds = array<i64: 1>}, {transform_indices = @transform_1, window_bounds = array<i64: 8, 16>}, {transform_indices = @transform_2, window_bounds = array<i64: 8, 16>}, {transform_indices = @transform_3, window_bounds = array<i64: 8, 8>}, {transform_indices = @transform_4, window_bounds = array<i64: 8, 1>}, {transform_indices = @transform_5, window_bounds = array<i64: 1, 1>}]} {
    %c0_i32 = arith.constant 0 : i32
    %0 = arith.cmpi eq, %arg1, %c0_i32 : i32
    %1 = arith.extui %0 : i1 to i32
    %c0_i32_0 = arith.constant 0 : i32
    %2 = arith.cmpi ne, %1, %c0_i32_0 : i32
    scf.if %2 {
      %cst_32 = arith.constant 0.000000e+00 : f32
      %67 = vector.broadcast %cst_32 : f32 to vector<1x1xf32>
      %c0_33 = arith.constant 0 : index
      %c0_34 = arith.constant 0 : index
      %68 = vector.load %arg8[%c0_33, %c0_34] : memref<1x1xf32, #tpu.memory_space<vmem>>, vector<1x1xf32>
      tpu.vector_store %arg8[%c0_33, %c0_34], %67 {strides = array<i32>} : memref<1x1xf32, #tpu.memory_space<vmem>>, vector<1x1xf32>,
      %cst_35 = arith.constant 0.000000e+00 : f32
      %69 = vector.broadcast %cst_35 : f32 to vector<1x1xf32>
      %c0_36 = arith.constant 0 : index
      %c0_37 = arith.constant 0 : index
      %70 = vector.load %arg9[%c0_36, %c0_37] : memref<1x1xf32, #tpu.memory_space<vmem>>, vector<1x1xf32>
      tpu.vector_store %arg9[%c0_36, %c0_37], %69 {strides = array<i32>} : memref<1x1xf32, #tpu.memory_space<vmem>>, vector<1x1xf32>,
    } else {
    }
    %c0 = arith.constant 0 : index
    %c0_1 = arith.constant 0 : index
    %3 = vector.load %arg3[%c0, %c0_1] : memref<8x16xf32, #tpu.memory_space<vmem>>, vector<8x16xf32>
    %c0_2 = arith.constant 0 : index
    %c0_3 = arith.constant 0 : index
    %4 = vector.load %arg4[%c0_2, %c0_3] : memref<8x16xf32, #tpu.memory_space<vmem>>, vector<8x16xf32>
    %c0_4 = arith.constant 0 : index
    %c0_5 = arith.constant 0 : index
    %5 = vector.load %arg5[%c0_4, %c0_5] : memref<8x8xf32, #tpu.memory_space<vmem>>, vector<8x8xf32>
    %c0_6 = arith.constant 0 : index
    %c0_7 = arith.constant 0 : index
    %6 = vector.load %arg6[%c0_6, %c0_7] : memref<8x1xi32, #tpu.memory_space<vmem>>, vector<8x1xi32>
    %c1_i32 = arith.constant 1 : i32
    %7 = arith.muli %arg0, %c1_i32 : i32
    %8 = arith.addi %7, %arg1 : i32
    %c8_i32 = arith.constant 8 : i32
    %9 = arith.muli %8, %c8_i32 : i32
    %10 = tpu.iota {dimensions = array<i32: 0>} : vector<8x1xi32>
    %11 = vector.broadcast %9 : i32 to vector<8x1xi32>
    %12 = arith.addi %11, %10 : vector<8x1xi32>
    %c8_i32_8 = arith.constant 8 : i32
    %13 = vector.broadcast %c8_i32_8 : i32 to vector<8x1xi32>
    %14 = arith.cmpi slt, %12, %13 : vector<8x1xi32>
    %15 = math.log %4 : vector<8x16xf32>
    %cst = arith.constant dense<0.000000e+00> : vector<8xf32>
    %16 = vector.multi_reduction <add>, %15, %cst [1] : vector<8x16xf32> to vector<8xf32>
    %17 = vector.shape_cast %16 : vector<8xf32> to vector<8x1xf32>
    %cst_9 = arith.constant 6.250000e-02 : f32
    %18 = vector.broadcast %cst_9 : f32 to vector<8x1xf32>
    %19 = arith.mulf %17, %18 : vector<8x1xf32>
    %cst_10 = arith.constant -18.420681 : f32
    %20 = vector.broadcast %cst_10 : f32 to vector<8x1xf32>
    %21 = arith.maximumf %19, %20 : vector<8x1xf32>
    %cst_11 = arith.constant 0.000000e+00 : f32
    %22 = vector.broadcast %cst_11 : f32 to vector<8x1xf32>
    %23 = arith.subf %22, %21 : vector<8x1xf32>
    %24 = math.exp %23 : vector<8x1xf32>
    %cst_12 = arith.constant -3.000000e+01 : f32
    %cst_13 = arith.constant 3.000000e+01 : f32
    %25 = vector.broadcast %cst_12 : f32 to vector<8x16xf32>
    %26 = arith.maximumf %25, %3 : vector<8x16xf32>
    %27 = vector.broadcast %cst_13 : f32 to vector<8x16xf32>
    %28 = arith.minimumf %27, %26 : vector<8x16xf32>
    %29 = math.exp %28 : vector<8x16xf32>
    %cst_14 = arith.constant dense<0.000000e+00> : vector<8xf32>
    %30 = vector.multi_reduction <add>, %29, %cst_14 [1] : vector<8x16xf32> to vector<8xf32>
    %31 = vector.shape_cast %30 : vector<8xf32> to vector<8x1xf32>
    %32 = arith.mulf %4, %3 : vector<8x16xf32>
    %cst_15 = arith.constant dense<0.000000e+00> : vector<8xf32>
    %33 = vector.multi_reduction <add>, %32, %cst_15 [1] : vector<8x16xf32> to vector<8xf32>
    %34 = vector.shape_cast %33 : vector<8xf32> to vector<8x1xf32>
    %35 = arith.mulf %34, %24 : vector<8x1xf32>
    %36 = arith.subf %31, %35 : vector<8x1xf32>
    %c0_16 = arith.constant 0 : index
    %c0_17 = arith.constant 0 : index
    %37 = vector.load %arg8[%c0_16, %c0_17] : memref<1x1xf32, #tpu.memory_space<vmem>>, vector<1x1xf32>
    %cst_18 = arith.constant 0.000000e+00 : f32
    %38 = vector.broadcast %cst_18 : f32 to vector<8x1xf32>
    %39 = arith.select %14, %36, %38 : vector<8x1xi1>, vector<8x1xf32>
    %40 = vector.shape_cast %39 : vector<8x1xf32> to vector<1x8x1xf32>
    %cst_19 = arith.constant dense<0.000000e+00> : vector<1xf32>
    %41 = vector.multi_reduction <add>, %40, %cst_19 [1, 2] : vector<1x8x1xf32> to vector<1xf32>
    %42 = vector.shape_cast %41 : vector<1xf32> to vector<1x1x1xf32>
    %43 = vector.extract %42[0, 0, 0] : f32 from vector<1x1x1xf32>
    %44 = vector.broadcast %43 : f32 to vector<1x1xf32>
    %45 = arith.addf %37, %44 : vector<1x1xf32>
    %c0_20 = arith.constant 0 : index
    %c0_21 = arith.constant 0 : index
    %46 = vector.load %arg8[%c0_20, %c0_21] : memref<1x1xf32, #tpu.memory_space<vmem>>, vector<1x1xf32>
    tpu.vector_store %arg8[%c0_20, %c0_21], %45 {strides = array<i32>} : memref<1x1xf32, #tpu.memory_space<vmem>>, vector<1x1xf32>,
    %47 = tpu.iota {dimensions = array<i32: 1>} : vector<8x8xi32>
    %48 = vector.broadcast %6 : vector<8x1xi32> to vector<8x8xi32>
    %49 = arith.cmpi eq, %47, %48 : vector<8x8xi32>
    %cst_22 = arith.constant 0.000000e+00 : f32
    %50 = vector.broadcast %cst_22 : f32 to vector<8x8xf32>
    %51 = arith.select %49, %5, %50 : vector<8x8xi1>, vector<8x8xf32>
    %cst_23 = arith.constant dense<0.000000e+00> : vector<8xf32>
    %52 = vector.multi_reduction <add>, %51, %cst_23 [1] : vector<8x8xf32> to vector<8xf32>
    %53 = vector.shape_cast %52 : vector<8xf32> to vector<8x1xf32>
    %c0_24 = arith.constant 0 : index
    %c0_25 = arith.constant 0 : index
    %54 = vector.load %arg9[%c0_24, %c0_25] : memref<1x1xf32, #tpu.memory_space<vmem>>, vector<1x1xf32>
    %cst_26 = arith.constant 0.000000e+00 : f32
    %55 = vector.broadcast %cst_26 : f32 to vector<8x1xf32>
    %56 = arith.select %14, %53, %55 : vector<8x1xi1>, vector<8x1xf32>
    %57 = vector.shape_cast %56 : vector<8x1xf32> to vector<1x8x1xf32>
    %cst_27 = arith.constant dense<0.000000e+00> : vector<1xf32>
    %58 = vector.multi_reduction <add>, %57, %cst_27 [1, 2] : vector<1x8x1xf32> to vector<1xf32>
    %59 = vector.shape_cast %58 : vector<1xf32> to vector<1x1x1xf32>
    %60 = vector.extract %59[0, 0, 0] : f32 from vector<1x1x1xf32>
    %61 = vector.broadcast %60 : f32 to vector<1x1xf32>
    %62 = arith.addf %54, %61 : vector<1x1xf32>
    %c0_28 = arith.constant 0 : index
    %c0_29 = arith.constant 0 : index
    %63 = vector.load %arg9[%c0_28, %c0_29] : memref<1x1xf32, #tpu.memory_space<vmem>>, vector<1x1xf32>
    tpu.vector_store %arg9[%c0_28, %c0_29], %62 {strides = array<i32>} : memref<1x1xf32, #tpu.memory_space<vmem>>, vector<1x1xf32>,
    %c0_i32_30 = arith.constant 0 : i32
    %64 = arith.cmpi eq, %arg1, %c0_i32_30 : i32
    %65 = arith.extui %64 : i1 to i32
    %c0_i32_31 = arith.constant 0 : i32
    %66 = arith.cmpi ne, %65, %c0_i32_31 : i32
    scf.if %66 {
      %c0_32 = arith.constant 0 : index
      %67 = memref.load %arg2[%c0_32] : memref<1xf32, #tpu.memory_space<smem>>
      %c0_33 = arith.constant 0 : index
      %c0_34 = arith.constant 0 : index
      %68 = vector.load %arg8[%c0_33, %c0_34] : memref<1x1xf32, #tpu.memory_space<vmem>>, vector<1x1xf32>
      %69 = vector.broadcast %67 : f32 to vector<1x1xf32>
      %70 = arith.mulf %69, %68 : vector<1x1xf32>
      %c0_35 = arith.constant 0 : index
      %c0_36 = arith.constant 0 : index
      %71 = vector.load %arg9[%c0_35, %c0_36] : memref<1x1xf32, #tpu.memory_space<vmem>>, vector<1x1xf32>
      %cst_37 = arith.constant 1.250000e-01 : f32
      %72 = vector.broadcast %cst_37 : f32 to vector<1x1xf32>
      %73 = arith.mulf %71, %72 : vector<1x1xf32>
      %74 = arith.subf %70, %73 : vector<1x1xf32>
      %c0_38 = arith.constant 0 : index
      %c0_39 = arith.constant 0 : index
      %75 = vector.load %arg7[%c0_38, %c0_39] : memref<1x1xf32, #tpu.memory_space<vmem>>, vector<1x1xf32>
      tpu.vector_store %arg7[%c0_38, %c0_39], %74 {strides = array<i32>} : memref<1x1xf32, #tpu.memory_space<vmem>>, vector<1x1xf32>,
    } else {
    }
    return
  }
  func.func @transform_0(%arg0: i32, %arg1: i32) -> i32 {
    %c0_i32 = arith.constant 0 : i32
    %c0_i32_0 = arith.constant 0 : i32
    return %c0_i32 : i32
  }
  func.func @transform_1(%arg0: i32, %arg1: i32) -> (i32, i32) {
    %c1_i32 = arith.constant 1 : i32
    %0 = arith.muli %arg0, %c1_i32 : i32
    %1 = arith.addi %0, %arg1 : i32
    %c0_i32 = arith.constant 0 : i32
    %2 = arith.minsi %1, %c0_i32 : i32
    %c0_i32_0 = arith.constant 0 : i32
    %c0_i32_1 = arith.constant 0 : i32
    return %2, %c0_i32_0 : i32, i32
  }
  func.func @transform_2(%arg0: i32, %arg1: i32) -> (i32, i32) {
    %c1_i32 = arith.constant 1 : i32
    %0 = arith.muli %arg0, %c1_i32 : i32
    %1 = arith.addi %0, %arg1 : i32
    %c0_i32 = arith.constant 0 : i32
    %2 = arith.minsi %1, %c0_i32 : i32
    %c0_i32_0 = arith.constant 0 : i32
    %c0_i32_1 = arith.constant 0 : i32
    return %2, %c0_i32_0 : i32, i32
  }
  func.func @transform_3(%arg0: i32, %arg1: i32) -> (i32, i32) {
    %c1_i32 = arith.constant 1 : i32
    %0 = arith.muli %arg0, %c1_i32 : i32
    %1 = arith.addi %0, %arg1 : i32
    %c0_i32 = arith.constant 0 : i32
    %2 = arith.minsi %1, %c0_i32 : i32
    %c0_i32_0 = arith.constant 0 : i32
    %c0_i32_1 = arith.constant 0 : i32
    return %2, %c0_i32_0 : i32, i32
  }
  func.func @transform_4(%arg0: i32, %arg1: i32) -> (i32, i32) {
    %c1_i32 = arith.constant 1 : i32
    %0 = arith.muli %arg0, %c1_i32 : i32
    %1 = arith.addi %0, %arg1 : i32
    %c0_i32 = arith.constant 0 : i32
    %2 = arith.minsi %1, %c0_i32 : i32
    %c0_i32_0 = arith.constant 0 : i32
    %c0_i32_1 = arith.constant 0 : i32
    return %2, %c0_i32_0 : i32, i32
  }
  func.func @transform_5(%arg0: i32, %arg1: i32) -> (i32, i32) {
    %c0_i32 = arith.constant 0 : i32
    %c0_i32_0 = arith.constant 0 : i32
    return %arg0, %c0_i32 : i32, i32
  }
}

</mosaic_0001>

<llo_original>
// kernel: tpu_custom_call.1
$region0: #{tpu_custom_call.1}
  #allocation0 [shape = 'u32[]', space=smem, size = 0x4, offset = 0x4, fixed_abs, tag = 'smem constant byte address 0x4 - core index']
  #allocation1 [shape = 'u32[144,128]{1,0:T(1,128)}', space=vmem, size = 0x12000, scoped, tag = 'internal scratch']
  #allocation2 [shape = 'f32[1,1]{1,0:T(1,128)}', space=vmem, size = 0x200, scoped, tag = 'scratch operand']
  #allocation3 [shape = 'f32[1,1]{1,0:T(1,128)}', space=vmem, size = 0x200, scoped, tag = 'scratch operand']
  #allocation4 [shape = 'f32[1]{0:T(128)S(6)}', space=smem, size = 0x200, scoped, tag = 'scoped memory for tpu_custom_call.1']
  %s0 = inlined_call_operand.<no memory space> [shape: f32[1], index: 0, kind: input, shape index: {}]
  %s1 = inlined_call_operand.vmem [shape: f32[8,16], index: 1, kind: input, shape index: {}]
  %s2 = inlined_call_operand.vmem [shape: f32[8,16], index: 2, kind: input, shape index: {}]
  %s3 = inlined_call_operand.hbm [shape: f32[8,8], index: 3, kind: input, shape index: {}]
  %s4 = inlined_call_operand.vmem [shape: s32[8,1], index: 4, kind: input, shape index: {}]
  %s5 = inlined_call_operand.hbm [shape: f32[1,1], index: 5, kind: output, shape index: {}]
  %s6 = sld [smem:[#allocation0]]
  $region42: #{tpu_custom_call.1} parent=0
    _
  %s8 = ssub.s32 1, %s6
  %s9 = scalar_select 0, %s8, %s6
  %10 = sst [smem:[#allocation4]] %s0
  $region1: #{tpu_custom_call.1} parent=0
    #allocation5 [shape = 'u8[4096]{0}', space=vmem, size = 0x1000, scoped, tag = 'input window, operand 3, single buffered']
    #allocation6 [shape = 's32[1]{0}', space=sflag, size = 0x4, scoped, tag = 'scoped memory for tpu_custom_call.1']
    #allocation7 [shape = 's32[1]{0}', space=sflag, size = 0x4, scoped, tag = 'scoped memory for tpu_custom_call.1']
    #allocation8 [shape = 'u8[512]{0}', space=vmem, size = 0x400, scoped, tag = 'output window, operand 0, single buffered']
    %11 = vsyncpa [#allocation6], 0
    %12 = vsyncpa [#allocation7], 0
    // Predicated region
    $region2: #{tpu_custom_call.1} parent=1 // pred_check
      _
    $region3: #{tpu_custom_call.1} parent=1 // pred_check_branch
      %14 = sbr.rel (0) target = $region5
    $region4: #{tpu_custom_call.1} parent=1 // pred_region
      _
    $region5: #{tpu_custom_call.1} parent=1 // pred_fallthru
      _
    // Predicated region
    $region6: #{tpu_custom_call.1} parent=1 // pred_check
      _
    $region7: #{tpu_custom_call.1} parent=1 // pred_check_branch
      %16 = sbr.rel (0) target = $region9
    $region8: #{tpu_custom_call.1} parent=1 // pred_region
      %s17 = sadd.s32 0, 0
      %p18 = scmp.lt.s32.totalorder %s17, 0
      %s19 = scalar_select %p18, %s17, 0
      %p20 = scmp.lt.s32.totalorder %s19, 0
      %s21 = scalar_select %p20, %s19, 0
      %s22 = smul.addr %s21, 8
      %s23 = scalar_lea.vmem %s1, %s22
      %s24 = sadd.s32 0, 0
      %p25 = scmp.lt.s32.totalorder %s24, 0
      %s26 = scalar_select %p25, %s24, 0
    $region9: #{tpu_custom_call.1} parent=1 // pred_fallthru
      _
    // Predicated region
    $region10: #{tpu_custom_call.1} parent=1 // pred_check
      _
    $region11: #{tpu_custom_call.1} parent=1 // pred_check_branch
      %28 = sbr.rel (0) target = $region13
    $region12: #{tpu_custom_call.1} parent=1 // pred_region
      %s29 = sadd.s32 0, 0
      %p30 = scmp.lt.s32.totalorder %s29, 0
      %s31 = scalar_select %p30, %s29, 0
      %p32 = scmp.lt.s32.totalorder %s31, 0
      %s33 = scalar_select %p32, %s31, 0
      %s34 = smul.addr %s33, 8
      %s35 = scalar_lea.vmem %s2, %s34
      %s36 = sadd.s32 0, 0
      %p37 = scmp.lt.s32.totalorder %s36, 0
      %s38 = scalar_select %p37, %s36, 0
    $region13: #{tpu_custom_call.1} parent=1 // pred_fallthru
      _
    // Predicated region
    $region14: #{tpu_custom_call.1} parent=1 // pred_check
      _
    $region15: #{tpu_custom_call.1} parent=1 // pred_check_branch
      %40 = sbr.rel (0) target = $region17
    $region16: #{tpu_custom_call.1} parent=1 // pred_region
      %s41 = sadd.s32 0, 0
      %p42 = scmp.lt.s32.totalorder %s41, 0
      %s43 = scalar_select %p42, %s41, 0
      %s45 = ssub.s32 128, 128
      %46 = vsyncadd [#allocation6], %s45
      %s47 = smul.addr %s43, 128
      %s48 = scalar_lea.hbm %s3, %s47
      %s50 = sshll.u32 [#allocation5], 4
      %s51 = int_to_ptr.vmem [resolvable:$true] %s50
      %53 = dma.hbm_to_vmem [thread:$0]  %s48, 128, %s51, [#allocation6]
    $region17: #{tpu_custom_call.1} parent=1 // pred_fallthru
      _
    // Predicated region
    $region18: #{tpu_custom_call.1} parent=1 // pred_check
      _
    $region19: #{tpu_custom_call.1} parent=1 // pred_check_branch
      %55 = sbr.rel (0) target = $region21
    $region20: #{tpu_custom_call.1} parent=1 // pred_region
      %s56 = sadd.s32 0, 0
      %p57 = scmp.lt.s32.totalorder %s56, 0
      %s58 = scalar_select %p57, %s56, 0
      %p59 = scmp.lt.s32.totalorder %s58, 0
      %s60 = scalar_select %p59, %s58, 0
      %s61 = smul.addr %s60, 8
      %s62 = scalar_lea.vmem %s4, %s61
      %s63 = sadd.s32 0, 0
      %p64 = scmp.lt.s32.totalorder %s63, 0
      %s65 = scalar_select %p64, %s63, 0
    $region21: #{tpu_custom_call.1} parent=1 // pred_fallthru
      _
    // Predicated region
    $region22: #{tpu_custom_call.1} parent=1 // pred_check
      _
    $region23: #{tpu_custom_call.1} parent=1 // pred_check_branch
      %67 = sbr.rel (0) target = $region25
    $region24: #{tpu_custom_call.1} parent=1 // pred_region
      %68 = dma.done [#allocation6], 128
    $region25: #{tpu_custom_call.1} parent=1 // pred_fallthru
      _
    %s69 = sadd.s32 0, 0
    %p70 = scmp.lt.s32.totalorder %s69, 0
    %s71 = scalar_select %p70, %s69, 0
    %p72 = scmp.lt.s32.totalorder %s71, 0
    %s73 = scalar_select %p72, %s71, 0
    %s74 = smul.addr %s73, 8
    %s75 = scalar_lea.vmem %s1, %s74
    %s76 = sadd.s32 0, 0
    %p77 = scmp.lt.s32.totalorder %s76, 0
    %s78 = scalar_select %p77, %s76, 0
    %p79 = scmp.lt.s32.totalorder %s78, 0
    %s80 = scalar_select %p79, %s78, 0
    %s81 = smul.addr %s80, 8
    %s82 = scalar_lea.vmem %s2, %s81
    %s83 = sadd.s32 0, 0
    %p84 = scmp.lt.s32.totalorder %s83, 0
    %s85 = scalar_select %p84, %s83, 0
    %p86 = scmp.lt.s32.totalorder %s85, 0
    %s87 = scalar_select %p86, %s85, 0
    %s88 = smul.addr %s87, 8
    %s89 = scalar_lea.vmem %s4, %s88
    %s90 = sadd.s32 0, 0
    %p91 = scmp.lt.s32.totalorder %s90, 0
    %s92 = scalar_select %p91, %s90, 0
    %p93 = scmp.lt.s32.totalorder %s92, 0
    %s94 = scalar_select %p93, %s92, 0
    %s95 = smul.addr %s94, 8
    %s96 = scalar_lea.vmem %s1, %s95
    %s97 = sadd.s32 0, 0
    %p98 = scmp.lt.s32.totalorder %s97, 0
    %s99 = scalar_select %p98, %s97, 0
    %s100 = sadd.s32 0, 0
    %p101 = scmp.lt.s32.totalorder %s100, 0
    %s102 = scalar_select %p101, %s100, 0
    %p103 = scmp.lt.s32.totalorder %s102, 0
    %s104 = scalar_select %p103, %s102, 0
    %s105 = smul.addr %s104, 8
    %s106 = scalar_lea.vmem %s2, %s105
    %s107 = sadd.s32 0, 0
    %p108 = scmp.lt.s32.totalorder %s107, 0
    %s109 = scalar_select %p108, %s107, 0
    %s110 = sadd.s32 0, 0
    %p111 = scmp.lt.s32.totalorder %s110, 0
    %s112 = scalar_select %p111, %s110, 0
    %s113 = sadd.s32 0, 0
    %p114 = scmp.lt.s32.totalorder %s113, 0
    %s115 = scalar_select %p114, %s113, 0
    %p116 = scmp.lt.s32.totalorder %s115, 0
    %s117 = scalar_select %p116, %s115, 0
    %s118 = smul.addr %s117, 8
    %s119 = scalar_lea.vmem %s4, %s118
    %s120 = sadd.s32 0, 0
    %p121 = scmp.lt.s32.totalorder %s120, 0
    %s122 = scalar_select %p121, %s120, 0
    %p123 = scmp.eq.s32.totalorder 0, 0
    // Predicated region
    $region26: #{tpu_custom_call.1} parent=1 // pred_check
      %p124 = pneg %p123
    $region27: #{tpu_custom_call.1} parent=1 // pred_check_branch
      %126 = sbr.rel (%p124) target = $region29
    $region28: #{tpu_custom_call.1} parent=1 // pred_region
      %vm127 = vcmask 0
      %128 = vst.msk [vmem:[#allocation2] sm:$0x1] %vm127, 0.0
      %129 = vst.msk [vmem:[#allocation3] sm:$0x1] %vm127, 0.0
    $region29: #{tpu_custom_call.1} parent=1 // pred_fallthru
      _
    %v130 = vld [vmem:[%s96] sm:$0xff]
    %v131 = vld [vmem:[%s106] sm:$0xff]
    %v132 = vld [vmem:[#allocation5] sm:$0xff]
    %v133 = vld [vmem:[%s119] sm:$0xff]
    %s134 = sadd.s32 0, 0
    %s135 = smul.u32 %s134, 8
    %v136 = vlaneseq
    %v137 = vshrl.u32 %v136, 7
    %v138 = vstv %s135
    %v139 = vadd.s32 %v138, %v137
    %vm140 = vcmp.lt.s32.totalorder %v139, 8
    %v141 = vlog2.pop %v131
    %v142 = vmul.f32 %v141, 0.6931472
    %vm143 = vcmask 130048
    %v144 = vsel %vm143, %v142, 0.0
    %145 = vadd.xlane.f32.xlu0 %v144
    %v146 = vpop.xlane.xlu0 %145
    %v147 = vmul.f32 %v146, 0.0625
    %v148 = vmax.f32 %v147, -18.420681
    %v149 = vsub.f32 0.0, %v148
    %v150 = vmul.f32 %v149, 1.442695
    %v151 = vpow.pop %v150
    %v152 = vmax.f32 %v130, -30.0
    %v153 = vmin.f32 %v152, 30.0
    %v154 = vmul.f32 %v153, 1.442695
    %v155 = vpow.pop %v154
    %v156 = vsel %vm143, %v155, 0.0
    %157 = vadd.xlane.f32.xlu0 %v156
    %v158 = vpop.xlane.xlu0 %157
    %v159 = vmul.f32 %v131, %v130
    %v160 = vsel %vm143, %v159, 0.0
    %161 = vadd.xlane.f32.xlu0 %v160
    %v162 = vpop.xlane.xlu0 %161
    %v163 = vmul.f32 %v162, %v151
    %v164 = vsub.f32 %v158, %v163
    %v165 = vld [vmem:[#allocation2] sm:$0x1]
    %v166 = vsel %vm140, %v164, 0.0
    %vm167 = vcmask 7168
    %v168 = vsel %vm167, %v166, 0.0
    %169 = vadd.xlane.f32.xlu0 %v168
    %v170 = vpop.xlane.xlu0 %169
    %v171 = vrot.slane %v170, 4
    %v172 = vadd.f32 %v170, %v171
    %v173 = vrot.slane %v172, 2
    %v174 = vadd.f32 %v172, %v173
    %v175 = vrot.slane %v174, 1
    %v176 = vadd.f32 %v174, %v175
    %s177 = vtos %v176
    %v178 = vstv %s177
    %v179 = vadd.f32 %v165, %v178
    %vm180 = vcmask 0
    %181 = vst.msk [vmem:[#allocation2] sm:$0x1] %vm180, %v179
    %v182 = vlaneseq
    %v183 = vand.u32 %v182, 127
    %184 = vset.pattern.permute.xlu0 0
    %185 = vperm.xlu0 %184, %v133
    %v186 = vpop.permute.xlu0 %185
    %vm187 = vcmp.eq.s32.totalorder %v183, %v186
    %v188 = vsel %vm187, %v132, 0.0
    %vm189 = vcmask 64512
    %v190 = vsel %vm189, %v188, 0.0
    %191 = vadd.xlane.f32.xlu0 %v190
    %v192 = vpop.xlane.xlu0 %191
    %v193 = vld [vmem:[#allocation3] sm:$0x1]
    %v194 = vsel %vm140, %v192, 0.0
    %v195 = vsel %vm167, %v194, 0.0
    %196 = vadd.xlane.f32.xlu0 %v195
    %v197 = vpop.xlane.xlu0 %196
    %v198 = vrot.slane %v197, 4
    %v199 = vadd.f32 %v197, %v198
    %v200 = vrot.slane %v199, 2
    %v201 = vadd.f32 %v199, %v200
    %v202 = vrot.slane %v201, 1
    %v203 = vadd.f32 %v201, %v202
    %s204 = vtos %v203
    %v205 = vstv %s204
    %v206 = vadd.f32 %v193, %v205
    %207 = vst.msk [vmem:[#allocation3] sm:$0x1] %vm180, %v206
    // Predicated region
    $region30: #{tpu_custom_call.1} parent=1 // pred_check
      %p208 = pneg %p123
    $region31: #{tpu_custom_call.1} parent=1 // pred_check_branch
      %210 = sbr.rel (%p208) target = $region33
    $region32: #{tpu_custom_call.1} parent=1 // pred_region
      %s211 = sld [smem:[#allocation4]]
      %v212 = vld [vmem:[#allocation2] sm:$0x1]
      %v213 = vstv %s211
      %v214 = vmul.f32 %v213, %v212
      %v215 = vld [vmem:[#allocation3] sm:$0x1]
      %v216 = vmul.f32 %v215, 0.125
      %v217 = vsub.f32 %v214, %v216
      %218 = vst.msk [vmem:[#allocation8] sm:$0x1] %vm180, %v217
    $region33: #{tpu_custom_call.1} parent=1 // pred_fallthru
      _
    // Predicated region
    $region34: #{tpu_custom_call.1} parent=1 // pred_check
      _
    $region35: #{tpu_custom_call.1} parent=1 // pred_check_branch
      %220 = sbr.rel (0) target = $region37
    $region36: #{tpu_custom_call.1} parent=1 // pred_region
      %s222 = ssub.s32 16, 16
      %223 = vsyncadd [#allocation7], %s222
      %s225 = sshll.u32 [#allocation8], 4
      %s226 = int_to_ptr.vmem [resolvable:$true] %s225
      %228 = dma.vmem_to_hbm [thread:$0]  %s226, 16, %s5, [#allocation7]
    $region37: #{tpu_custom_call.1} parent=1 // pred_fallthru
      _
    // Predicated region
    $region38: #{tpu_custom_call.1} parent=1 // pred_check
      _
    $region39: #{tpu_custom_call.1} parent=1 // pred_check_branch
      %230 = sbr.rel (0) target = $region41
    $region40: #{tpu_custom_call.1} parent=1 // pred_region
      %231 = dma.done [#allocation7], 16
    $region41: #{tpu_custom_call.1} parent=1 // pred_fallthru
      _
    %232 = vsyncpa [#allocation6], 1
    %233 = vsyncpa [#allocation7], 1

</llo_original>
